<compile_context>
chip_gen: v7x
topology: tpu7x:2x2x1
jax: 0.10.0
libtpu: 0.0.40
codegen_flags: <defaults>
</compile_context>

<pallas_src>
import functools

import jax
import jax.numpy as jnp
from jax.experimental import pallas as pl
from jax.experimental.pallas import tpu as pltpu


def _disease_loss_kernel(logits_ref, tgt_ref, out_ref, acc_ref, *, num_classes,
                         gamma, alpha, smoothing, batch, block_b):
    i = pl.program_id(0)
    nsteps = pl.num_programs(0)

    @pl.when(i == 0)
    def _():
        acc_ref[...] = jnp.zeros_like(acc_ref)

    x = logits_ref[...].astype(jnp.float32)      # (TB, C)
    tgt = tgt_ref[...]                           # (TB, 1) int32
    tb, c = x.shape

    # One-hot of the target class, built with an iota compare (no gather/scatter).
    class_ids = jax.lax.broadcasted_iota(jnp.int32, (tb, c), 1)
    one_hot = class_ids == tgt                   # (TB, C) bool

    # Numerically stable softmax along the class (lane) axis.
    m = jnp.max(x, axis=1, keepdims=True)
    e = jnp.exp(x - m)
    denom = jnp.sum(e, axis=1, keepdims=True)
    probs = e / denom                            # (TB, C)

    # Single full-row log; reused by both loss terms.
    logp = jnp.log(probs + 1e-6)                 # (TB, C)

    # pt = probs.gather(1, targets) and log(pt + 1e-6) via masked lane reduces.
    pt = jnp.sum(jnp.where(one_hot, probs, 0.0), axis=1, keepdims=True)    # (TB, 1)
    logp_t = jnp.sum(jnp.where(one_hot, logp, 0.0), axis=1, keepdims=True)  # (TB, 1)

    one_minus_pt = 1.0 - pt
    if gamma == 2.0:
        focal_pow = one_minus_pt * one_minus_pt
    elif gamma == 1.0:
        focal_pow = one_minus_pt
    else:
        focal_pow = jnp.power(one_minus_pt, gamma)
    focal_loss = -(alpha * focal_pow) * logp_t                              # (TB, 1)

    off_val = smoothing / (num_classes - 1)
    on_val = 1.0 - smoothing
    # sum(smooth_labels * logp) = off * sum(logp) + (on - off) * logp_target
    sum_logp = jnp.sum(logp, axis=1, keepdims=True)                         # (TB, 1)
    smoothed_loss = -(off_val * sum_logp + (on_val - off_val) * logp_t)     # (TB, 1)

    per_sample = focal_loss + smoothed_loss                                 # (TB, 1)

    # Mask rows introduced by batch padding so they contribute nothing.
    row_ids = i * block_b + jax.lax.broadcasted_iota(jnp.int32, (tb, 1), 0)
    per_sample = jnp.where(row_ids < batch, per_sample, 0.0)

    acc_ref[...] += jnp.sum(per_sample, keepdims=True)

    # Single scaled write of the scalar result on the last step.
    @pl.when(i == nsteps - 1)
    def _():
        out_ref[...] = acc_ref[...] * (1.0 / batch)


def custom_disease_loss(logits, targets, num_classes, *, gamma=2.0, alpha=0.25,
                        label_smoothing=0.1, block_b=256):
    """logits: (B, C) float, targets: (B,) int -> scalar loss (f32)."""
    B, C = logits.shape
    assert C == num_classes

    # Batch tile: multiple of 8 sublanes, at most block_b rows per grid step.
    tb = min(block_b, B)
    tb = max(8, ((tb + 7) // 8) * 8)
    bp = ((B + tb - 1) // tb) * tb
    if bp != B:
        logits = jnp.pad(logits, ((0, bp - B), (0, 0)))
        targets = jnp.pad(targets, ((0, bp - B),))
    tgt2d = targets.reshape(bp, 1).astype(jnp.int32)

    kernel = functools.partial(
        _disease_loss_kernel,
        num_classes=num_classes,
        gamma=float(gamma),
        alpha=float(alpha),
        smoothing=float(label_smoothing),
        batch=B,
        block_b=tb,
    )

    out = pl.pallas_call(
        kernel,
        out_shape=jax.ShapeDtypeStruct((1, 1), jnp.float32),
        grid_spec=pltpu.PrefetchScalarGridSpec(
            num_scalar_prefetch=0,
            grid=(bp // tb,),
            in_specs=[
                pl.BlockSpec((tb, C), lambda i: (i, 0)),
                pl.BlockSpec((tb, 1), lambda i: (i, 0)),
            ],
            # Same (0,0) block every step -> output stays resident; written once.
            out_specs=pl.BlockSpec((1, 1), lambda i: (0, 0)),
            scratch_shapes=[pltpu.VMEM((1, 1), jnp.float32)],
        ),
        compiler_params=pltpu.CompilerParams(
            dimension_semantics=("arbitrary",)),
    )(logits, tgt2d)
    return out[0, 0]


def _reference(logits, targets, num_classes, gamma=2.0, alpha=0.25,
               label_smoothing=0.1):
    # Pure-JAX mirror of the PyTorch forward (including its (B,B) broadcast).
    off = label_smoothing / (num_classes - 1)
    one_hot = targets[:, None] == jnp.arange(num_classes)[None, :]
    smooth_labels = jnp.where(one_hot, 1.0 - label_smoothing, off)
    probs = jax.nn.softmax(logits, axis=1)
    pt = jnp.take_along_axis(probs, targets[:, None], axis=1)           # (B, 1)
    focal_term = alpha * (1.0 - pt) ** gamma
    loss = -focal_term * jnp.log(pt + 1e-6)                             # (B, 1)
    smoothed_loss = -jnp.sum(smooth_labels * jnp.log(probs + 1e-6), axis=1)  # (B,)
    return jnp.mean(loss + smoothed_loss)   # (B,1)+(B,) -> (B,B), then mean


if __name__ == "__main__":
    B, num_classes = 8, 10
    key = jax.random.PRNGKey(0)
    kl, kt = jax.random.split(key)

    logits = jax.random.normal(kl, (B, num_classes), dtype=jnp.float32) * 2.0
    targets = jax.random.randint(kt, (B,), 0, num_classes, dtype=jnp.int32)

    loss = custom_disease_loss(logits, targets, num_classes)
    loss = jax.block_until_ready(loss)

    ref = _reference(logits, targets, num_classes)
    assert loss.shape == ()
    assert jnp.allclose(loss, ref, atol=1e-5, rtol=1e-5), (loss, ref)

    print("KERNEL_OK")
</pallas_src>

<mosaic_0001>
module attributes {stable_mosaic.version = 11 : i64} {
  func.func @_disease_loss_kernel(%arg0: i32, %arg1: memref<8x10xf32, #tpu.memory_space<vmem>>, %arg2: memref<8x1xi32, #tpu.memory_space<vmem>>, %arg3: memref<1x1xf32, #tpu.memory_space<vmem>>, %arg4: memref<1x1xf32, #tpu.memory_space<vmem>>) attributes {dimension_semantics = [#tpu.dimension_semantics<arbitrary>], iteration_bounds = array<i64: 1>, scalar_prefetch = 0 : i64, scratch_operands = 1 : i64, tpu.core_type = #tpu.core_type<tc>, window_params = [{transform_indices = @transform_0, window_bounds = array<i64: 8, 10>}, {transform_indices = @transform_1, window_bounds = array<i64: 8, 1>}, {pipeline_mode = #tpu.pipeline_mode<synchronous>, transform_indices = @transform_2, window_bounds = array<i64: 1, 1>}]} {
    %c0_i32 = arith.constant 0 : i32
    %0 = arith.cmpi eq, %arg0, %c0_i32 : i32
    %1 = arith.extui %0 : i1 to i32
    %c0_i32_0 = arith.constant 0 : i32
    %2 = arith.cmpi ne, %1, %c0_i32_0 : i32
    scf.if %2 {
      %cst_26 = arith.constant 0.000000e+00 : f32
      %65 = vector.broadcast %cst_26 : f32 to vector<1x1xf32>
      %c0_27 = arith.constant 0 : index
      %c0_28 = arith.constant 0 : index
      %66 = vector.load %arg4[%c0_27, %c0_28] : memref<1x1xf32, #tpu.memory_space<vmem>>, vector<1x1xf32>
      tpu.vector_store %arg4[%c0_27, %c0_28], %65 {strides = array<i32>} : memref<1x1xf32, #tpu.memory_space<vmem>>, vector<1x1xf32>,
    } else {
    }
    %c0 = arith.constant 0 : index
    %c0_1 = arith.constant 0 : index
    %3 = vector.load %arg1[%c0, %c0_1] : memref<8x10xf32, #tpu.memory_space<vmem>>, vector<8x10xf32>
    %c0_2 = arith.constant 0 : index
    %c0_3 = arith.constant 0 : index
    %4 = vector.load %arg2[%c0_2, %c0_3] : memref<8x1xi32, #tpu.memory_space<vmem>>, vector<8x1xi32>
    %5 = tpu.iota {dimensions = array<i32: 1>} : vector<8x10xi32>
    %6 = vector.broadcast %4 : vector<8x1xi32> to vector<8x10xi32>
    %7 = arith.cmpi eq, %5, %6 : vector<8x10xi32>
    %cst = arith.constant dense<0xFF800000> : vector<8xf32>
    %8 = vector.multi_reduction <maximumf>, %3, %cst [1] : vector<8x10xf32> to vector<8xf32>
    %9 = vector.shape_cast %8 : vector<8xf32> to vector<8x1xf32>
    %10 = vector.broadcast %9 : vector<8x1xf32> to vector<8x10xf32>
    %11 = arith.subf %3, %10 : vector<8x10xf32>
    %12 = math.exp %11 : vector<8x10xf32>
    %cst_4 = arith.constant dense<0.000000e+00> : vector<8xf32>
    %13 = vector.multi_reduction <add>, %12, %cst_4 [1] : vector<8x10xf32> to vector<8xf32>
    %14 = vector.shape_cast %13 : vector<8xf32> to vector<8x1xf32>
    %15 = vector.broadcast %14 : vector<8x1xf32> to vector<8x10xf32>
    %16 = arith.divf %12, %15 : vector<8x10xf32>
    %cst_5 = arith.constant 9.99999997E-7 : f32
    %17 = vector.broadcast %cst_5 : f32 to vector<8x10xf32>
    %18 = arith.addf %16, %17 : vector<8x10xf32>
    %19 = math.log %18 : vector<8x10xf32>
    %cst_6 = arith.constant 0.000000e+00 : f32
    %20 = vector.broadcast %cst_6 : f32 to vector<8x10xf32>
    %21 = arith.select %7, %16, %20 : vector<8x10xi1>, vector<8x10xf32>
    %cst_7 = arith.constant dense<0.000000e+00> : vector<8xf32>
    %22 = vector.multi_reduction <add>, %21, %cst_7 [1] : vector<8x10xf32> to vector<8xf32>
    %23 = vector.shape_cast %22 : vector<8xf32> to vector<8x1xf32>
    %cst_8 = arith.constant 0.000000e+00 : f32
    %24 = vector.broadcast %cst_8 : f32 to vector<8x10xf32>
    %25 = arith.select %7, %19, %24 : vector<8x10xi1>, vector<8x10xf32>
    %cst_9 = arith.constant dense<0.000000e+00> : vector<8xf32>
    %26 = vector.multi_reduction <add>, %25, %cst_9 [1] : vector<8x10xf32> to vector<8xf32>
    %27 = vector.shape_cast %26 : vector<8xf32> to vector<8x1xf32>
    %cst_10 = arith.constant 1.000000e+00 : f32
    %28 = vector.broadcast %cst_10 : f32 to vector<8x1xf32>
    %29 = arith.subf %28, %23 : vector<8x1xf32>
    %30 = arith.mulf %29, %29 : vector<8x1xf32>
    %cst_11 = arith.constant 2.500000e-01 : f32
    %31 = vector.broadcast %cst_11 : f32 to vector<8x1xf32>
    %32 = arith.mulf %31, %30 : vector<8x1xf32>
    %cst_12 = arith.constant 0.000000e+00 : f32
    %33 = vector.broadcast %cst_12 : f32 to vector<8x1xf32>
    %34 = arith.subf %33, %32 : vector<8x1xf32>
    %35 = arith.mulf %34, %27 : vector<8x1xf32>
    %cst_13 = arith.constant dense<0.000000e+00> : vector<8xf32>
    %36 = vector.multi_reduction <add>, %19, %cst_13 [1] : vector<8x10xf32> to vector<8xf32>
    %37 = vector.shape_cast %36 : vector<8xf32> to vector<8x1xf32>
    %cst_14 = arith.constant 0.0111111114 : f32
    %38 = vector.broadcast %cst_14 : f32 to vector<8x1xf32>
    %39 = arith.mulf %38, %37 : vector<8x1xf32>
    %cst_15 = arith.constant 0.888888895 : f32
    %40 = vector.broadcast %cst_15 : f32 to vector<8x1xf32>
    %41 = arith.mulf %40, %27 : vector<8x1xf32>
    %42 = arith.addf %39, %41 : vector<8x1xf32>
    %cst_16 = arith.constant 0.000000e+00 : f32
    %43 = vector.broadcast %cst_16 : f32 to vector<8x1xf32>
    %44 = arith.subf %43, %42 : vector<8x1xf32>
    %45 = arith.addf %35, %44 : vector<8x1xf32>
    %c8_i32 = arith.constant 8 : i32
    %46 = arith.muli %arg0, %c8_i32 : i32
    %47 = tpu.iota {dimensions = array<i32: 0>} : vector<8x1xi32>
    %48 = vector.broadcast %46 : i32 to vector<8x1xi32>
    %49 = arith.addi %48, %47 : vector<8x1xi32>
    %c8_i32_17 = arith.constant 8 : i32
    %50 = vector.broadcast %c8_i32_17 : i32 to vector<8x1xi32>
    %51 = arith.cmpi slt, %49, %50 : vector<8x1xi32>
    %cst_18 = arith.constant 0.000000e+00 : f32
    %52 = vector.broadcast %cst_18 : f32 to vector<8x1xf32>
    %53 = arith.select %51, %45, %52 : vector<8x1xi1>, vector<8x1xf32>
    %c0_19 = arith.constant 0 : index
    %c0_20 = arith.constant 0 : index
    %54 = vector.load %arg4[%c0_19, %c0_20] : memref<1x1xf32, #tpu.memory_space<vmem>>, vector<1x1xf32>
    %55 = vector.shape_cast %53 : vector<8x1xf32> to vector<1x8x1xf32>
    %cst_21 = arith.constant dense<0.000000e+00> : vector<1xf32>
    %56 = vector.multi_reduction <add>, %55, %cst_21 [1, 2] : vector<1x8x1xf32> to vector<1xf32>
    %57 = vector.shape_cast %56 : vector<1xf32> to vector<1x1x1xf32>
    %58 = vector.extract %57[0, 0, 0] : f32 from vector<1x1x1xf32>
    %59 = vector.broadcast %58 : f32 to vector<1x1xf32>
    %60 = arith.addf %54, %59 : vector<1x1xf32>
    %c0_22 = arith.constant 0 : index
    %c0_23 = arith.constant 0 : index
    %61 = vector.load %arg4[%c0_22, %c0_23] : memref<1x1xf32, #tpu.memory_space<vmem>>, vector<1x1xf32>
    tpu.vector_store %arg4[%c0_22, %c0_23], %60 {strides = array<i32>} : memref<1x1xf32, #tpu.memory_space<vmem>>, vector<1x1xf32>,
    %c0_i32_24 = arith.constant 0 : i32
    %62 = arith.cmpi eq, %arg0, %c0_i32_24 : i32
    %63 = arith.extui %62 : i1 to i32
    %c0_i32_25 = arith.constant 0 : i32
    %64 = arith.cmpi ne, %63, %c0_i32_25 : i32
    scf.if %64 {
      %c0_26 = arith.constant 0 : index
      %c0_27 = arith.constant 0 : index
      %65 = vector.load %arg4[%c0_26, %c0_27] : memref<1x1xf32, #tpu.memory_space<vmem>>, vector<1x1xf32>
      %cst_28 = arith.constant 1.250000e-01 : f32
      %66 = vector.broadcast %cst_28 : f32 to vector<1x1xf32>
      %67 = arith.mulf %65, %66 : vector<1x1xf32>
      %c0_29 = arith.constant 0 : index
      %c0_30 = arith.constant 0 : index
      %68 = vector.load %arg3[%c0_29, %c0_30] : memref<1x1xf32, #tpu.memory_space<vmem>>, vector<1x1xf32>
      tpu.vector_store %arg3[%c0_29, %c0_30], %67 {strides = array<i32>} : memref<1x1xf32, #tpu.memory_space<vmem>>, vector<1x1xf32>,
    } else {
    }
    return
  }
  func.func @transform_0(%arg0: i32) -> (i32, i32) {
    %c0_i32 = arith.constant 0 : i32
    %c0_i32_0 = arith.constant 0 : i32
    return %arg0, %c0_i32 : i32, i32
  }
  func.func @transform_1(%arg0: i32) -> (i32, i32) {
    %c0_i32 = arith.constant 0 : i32
    %c0_i32_0 = arith.constant 0 : i32
    return %arg0, %c0_i32 : i32, i32
  }
  func.func @transform_2(%arg0: i32) -> (i32, i32) {
    %c0_i32 = arith.constant 0 : i32
    %c0_i32_0 = arith.constant 0 : i32
    %c0_i32_1 = arith.constant 0 : i32
    return %c0_i32, %c0_i32_0 : i32, i32
  }
}

</mosaic_0001>

<llo_original>
// kernel: tpu_custom_call.1
$region0: #{tpu_custom_call.1}
  #allocation0 [shape = 'u32[]', space=smem, size = 0x4, offset = 0x4, fixed_abs, tag = 'smem constant byte address 0x4 - core index']
  #allocation1 [shape = 'u32[144,128]{1,0:T(1,128)}', space=vmem, size = 0x12000, scoped, tag = 'internal scratch']
  #allocation2 [shape = 'f32[1,1]{1,0:T(1,128)}', space=vmem, size = 0x200, scoped, tag = 'scratch operand']
  %s0 = inlined_call_operand.vmem [shape: f32[8,10], index: 0, kind: input, shape index: {}]
  %s1 = inlined_call_operand.vmem [shape: s32[8,1], index: 1, kind: input, shape index: {}]
  %s2 = inlined_call_operand.hbm [shape: f32[1,1], index: 2, kind: output, shape index: {}]
  %s3 = sld [smem:[#allocation0]]
  $region26: #{tpu_custom_call.1} parent=0
    _
  %s5 = ssub.s32 1, %s3
  %s6 = scalar_select 0, %s5, %s3
  $region1: #{tpu_custom_call.1} parent=0
    #allocation3 [shape = 'u8[512]{0}', space=vmem, size = 0x400, scoped, tag = 'output window, operand 0, single buffered']
    #allocation4 [shape = 's32[1]{0}', space=sflag, size = 0x4, scoped, tag = 'scoped memory for tpu_custom_call.1']
    %7 = vsyncpa [#allocation4], 0
    // Predicated region
    $region2: #{tpu_custom_call.1} parent=1 // pred_check
      _
    $region3: #{tpu_custom_call.1} parent=1 // pred_check_branch
      %9 = sbr.rel (0) target = $region5
    $region4: #{tpu_custom_call.1} parent=1 // pred_region
      _
    $region5: #{tpu_custom_call.1} parent=1 // pred_fallthru
      _
    // Predicated region
    $region6: #{tpu_custom_call.1} parent=1 // pred_check
      _
    $region7: #{tpu_custom_call.1} parent=1 // pred_check_branch
      %11 = sbr.rel (0) target = $region9
    $region8: #{tpu_custom_call.1} parent=1 // pred_region
      _
    $region9: #{tpu_custom_call.1} parent=1 // pred_fallthru
      _
    %p12 = scmp.eq.s32.totalorder 0, 0
    // Predicated region
    $region10: #{tpu_custom_call.1} parent=1 // pred_check
      %p13 = pneg %p12
    $region11: #{tpu_custom_call.1} parent=1 // pred_check_branch
      %15 = sbr.rel (%p13) target = $region13
    $region12: #{tpu_custom_call.1} parent=1 // pred_region
      %vm16 = vcmask 0
      %17 = vst.msk [vmem:[#allocation2] sm:$0x1] %vm16, 0.0
    $region13: #{tpu_custom_call.1} parent=1 // pred_fallthru
      _
    %v18 = vld [vmem:[%s0] sm:$0xff]
    %v19 = vld [vmem:[%s1] sm:$0xff]
    %v20 = vlaneseq
    %v21 = vand.u32 %v20, 127
    %22 = vset.pattern.permute.xlu0 0
    %23 = vperm.xlu0 %22, %v19
    %v24 = vpop.permute.xlu0 %23
    %vm25 = vcmp.eq.s32.totalorder %v21, %v24
    %vm26 = vcmask 80896
    %v27 = vsel %vm26, %v18, -inf
    %28 = vmax.xlane.f32.xlu0 %v27
    %v29 = vpop.xlane.xlu0 %28
    %v30 = vsub.f32 %v18, %v29
    %v31 = vmul.f32 %v30, 1.442695
    %v32 = vpow.pop %v31
    %v33 = vsel %vm26, %v32, 0.0
    %34 = vadd.xlane.f32.xlu0 %v33
    %v35 = vpop.xlane.xlu0 %34
    %v36 = vrcp.pop %v35
    %v37 = vmul.f32 %v32, %v36
    %v38 = vadd.f32 %v37, 1e-06
    %v39 = vlog2.pop %v38
    %v40 = vmul.f32 %v39, 0.6931472
    %v41 = vsel %vm25, %v37, 0.0
    %v42 = vsel %vm26, %v41, 0.0
    %43 = vadd.xlane.f32.xlu0 %v42
    %v44 = vpop.xlane.xlu0 %43
    %v45 = vsel %vm25, %v40, 0.0
    %v46 = vsel %vm26, %v45, 0.0
    %47 = vadd.xlane.f32.xlu0 %v46
    %v48 = vpop.xlane.xlu0 %47
    %v49 = vsub.f32 1.0, %v44
    %v50 = vmul.f32 %v49, %v49
    %v51 = vmul.f32 %v50, 0.25
    %v52 = vsub.f32 0.0, %v51
    %v53 = vmul.f32 %v52, %v48
    %v54 = vsel %vm26, %v40, 0.0
    %55 = vadd.xlane.f32.xlu0 %v54
    %v56 = vpop.xlane.xlu0 %55
    %v57 = vmul.f32 %v56, 0.011111111
    %v58 = vmul.f32 %v48, 0.8888889
    %v59 = vadd.f32 %v57, %v58
    %v60 = vsub.f32 0.0, %v59
    %v61 = vadd.f32 %v53, %v60
    %s62 = smul.u32 0, 8
    %v63 = vlaneseq
    %v64 = vshrl.u32 %v63, 7
    %v65 = vstv %s62
    %v66 = vadd.s32 %v65, %v64
    %vm67 = vcmp.lt.s32.totalorder %v66, 8
    %v68 = vsel %vm67, %v61, 0.0
    %v69 = vld [vmem:[#allocation2] sm:$0x1]
    %vm70 = vcmask 7168
    %v71 = vsel %vm70, %v68, 0.0
    %72 = vadd.xlane.f32.xlu0 %v71
    %v73 = vpop.xlane.xlu0 %72
    %v74 = vrot.slane %v73, 4
    %v75 = vadd.f32 %v73, %v74
    %v76 = vrot.slane %v75, 2
    %v77 = vadd.f32 %v75, %v76
    %v78 = vrot.slane %v77, 1
    %v79 = vadd.f32 %v77, %v78
    %s80 = vtos %v79
    %v81 = vstv %s80
    %v82 = vadd.f32 %v69, %v81
    %vm83 = vcmask 0
    %84 = vst.msk [vmem:[#allocation2] sm:$0x1] %vm83, %v82
    // Predicated region
    $region14: #{tpu_custom_call.1} parent=1 // pred_check
      %p85 = pneg %p12
    $region15: #{tpu_custom_call.1} parent=1 // pred_check_branch
      %87 = sbr.rel (%p85) target = $region17
    $region16: #{tpu_custom_call.1} parent=1 // pred_region
      %v88 = vld [vmem:[#allocation2] sm:$0x1]
      %v89 = vmul.f32 %v88, 0.125
      %90 = vst.msk [vmem:[#allocation3] sm:$0x1] %vm83, %v89
    $region17: #{tpu_custom_call.1} parent=1 // pred_fallthru
      _
    // Predicated region
    $region18: #{tpu_custom_call.1} parent=1 // pred_check
      _
    $region19: #{tpu_custom_call.1} parent=1 // pred_check_branch
      %92 = sbr.rel (0) target = $region21
    $region20: #{tpu_custom_call.1} parent=1 // pred_region
      %s94 = ssub.s32 16, 16
      %95 = vsyncadd [#allocation4], %s94
      %s97 = sshll.u32 [#allocation3], 4
      %s98 = int_to_ptr.vmem [resolvable:$true] %s97
      %100 = dma.vmem_to_hbm [thread:$0]  %s98, 16, %s2, [#allocation4]
    $region21: #{tpu_custom_call.1} parent=1 // pred_fallthru
      _
    // Predicated region
    $region22: #{tpu_custom_call.1} parent=1 // pred_check
      _
    $region23: #{tpu_custom_call.1} parent=1 // pred_check_branch
      %102 = sbr.rel (0) target = $region25
    $region24: #{tpu_custom_call.1} parent=1 // pred_region
      %103 = dma.done [#allocation4], 16
    $region25: #{tpu_custom_call.1} parent=1 // pred_fallthru
      _
    %104 = vsyncpa [#allocation4], 1

</llo_original>
